<compile_context>
chip_gen: v7x
topology: tpu7x:2x2x1
jax: 0.10.0
libtpu: 0.0.40
codegen_flags: <defaults>
</compile_context>

<pallas_src>
import math

import jax
import jax.numpy as jnp
import numpy as np
from jax.experimental import pallas as pl
from jax.experimental.pallas import tpu as pltpu


def _gnn_kernel(src_ref, dst_ref,          # SMEM scalar-prefetch: [E] int32 each
                ope_ref,                   # SMEM [L] f32: (1 + eps) per layer
                x_ref,                     # VMEM [Np, Fp] f32 (initial node features)
                ea_ref,                    # VMEM [E,  Fp] f32 (edge features)
                w1_ref, b1_ref,            # VMEM [1, Fp, Fp] bf16 / [1, 1, Fp] f32 (this layer)
                w2_ref, b2_ref,            # VMEM [1, Fp, Fp] bf16 / [1, 1, Fp] f32 (BN folded)
                out_ref,                   # VMEM [Np, Fp] f32
                x_sc, agg_sc):             # VMEM scratch [Np, Fp] f32 each
    l = pl.program_id(0)
    n_edges = src_ref.shape[0]

    # Load the residual stream into persistent VMEM scratch once.
    @pl.when(l == 0)
    def _():
        x_sc[...] = x_ref[...]

    # ---- GINEConv aggregation: agg[dst] += relu(x[src] + edge_attr) ----------------
    # Exact f32 row gather / scatter-add driven by SMEM indices (no one-hot matmuls).
    agg_sc[...] = jnp.zeros_like(agg_sc)

    def edge_body(e, carry):
        s = src_ref[e]
        d = dst_ref[e]
        x_src = x_sc[pl.ds(s, 1), :]                                    # [1, Fp] f32
        msg = jnp.maximum(x_src + ea_ref[pl.ds(e, 1), :], 0.0)          # ReLU(x_j + e_ji)
        agg_sc[pl.ds(d, 1), :] = agg_sc[pl.ds(d, 1), :] + msg
        return carry

    jax.lax.fori_loop(0, n_edges, edge_body, 0)

    # ---- (1 + eps) * x + agg, then GIN MLP (bf16 MXU operands, f32 accumulation) ----
    x = x_sc[...]                                                       # [Np, Fp] f32
    one_plus_eps = ope_ref[l]                                           # SMEM scalar
    h = one_plus_eps * x + agg_sc[...]
    h = jnp.maximum(
        jnp.dot(h.astype(jnp.bfloat16), w1_ref[0],
                preferred_element_type=jnp.float32) + b1_ref[0], 0.0)
    h = jnp.dot(h.astype(jnp.bfloat16), w2_ref[0],
                preferred_element_type=jnp.float32) + b2_ref[0]         # BN folded in

    # ---- dropout (identity in eval) + residual --------------------------------------
    x_new = h + x
    x_sc[...] = x_new

    @pl.when(l == pl.num_programs(0) - 1)
    def _():
        out_ref[...] = jnp.maximum(x_new, 0.0)


def base_gnn_pallas(x, edge_attr, src, dst, eps, w1, b1, w2, b2, bn_scale, bn_shift,
                    *, lane=128, sublane=8):
    L = w1.shape[0]
    N, F = x.shape
    E = edge_attr.shape[0]

    # --- Fold eval-mode BatchNorm into the second Linear (pure affine refactor) ---
    w2f = w2 * bn_scale                    # scales output columns
    b2f = b2 * bn_scale + bn_shift

    # --- Padding: features -> multiple of 128 (lane-dense), nodes -> multiple of 8 ---
    # Padded feature lanes stay exactly zero through every layer (zero-padded weights/
    # biases, ReLU(0)=0), and padded node rows are never referenced by src/dst indices,
    # so the final [:N, :F] slice recovers the exact result.
    Fp = int(math.ceil(F / lane) * lane)
    Np = int(math.ceil(N / sublane) * sublane)
    pf, pn = Fp - F, Np - N

    def pad_last(a):
        return jnp.pad(a, [(0, 0)] * (a.ndim - 1) + [(0, pf)]) if pf else a

    def pad_last2(a):
        return jnp.pad(a, [(0, 0)] * (a.ndim - 2) + [(0, pf), (0, pf)]) if pf else a

    xp = pad_last(x).astype(jnp.float32)
    if pn:
        xp = jnp.pad(xp, [(0, pn), (0, 0)])
    eap = pad_last(edge_attr).astype(jnp.float32)
    w1p = pad_last2(w1).astype(jnp.bfloat16)
    w2p = pad_last2(w2f).astype(jnp.bfloat16)
    b1p = pad_last(b1).astype(jnp.float32)
    b2p = pad_last(b2f).astype(jnp.float32)

    one_plus_eps = (1.0 + eps.reshape(L)).astype(jnp.float32)
    src_i = src.astype(jnp.int32)
    dst_i = dst.astype(jnp.int32)

    # --- Explicit VMEM budget (headroom, capped below v7x's 64 MiB physical VMEM) ---
    resident_bytes = (Np * Fp * 4           # x input block
                      + E * Fp * 4          # edge_attr block
                      + Np * Fp * 4         # output block
                      + 2 * Np * Fp * 4)    # x / agg scratch
    per_layer_bytes = 2 * (Fp * Fp * 2) + 2 * (Fp * 4)   # w1,w2 bf16 + b1,b2 f32
    vmem_limit = int(min(max(2 * resident_bytes + 4 * per_layer_bytes + (2 << 20),
                             16 << 20), 48 << 20))

    flops = L * (4 * Np * Fp * Fp + 3 * E * Fp + 6 * Np * Fp)
    bytes_accessed = (Np * Fp * 4 + E * Fp * 4 + 2 * E * 4
                      + L * (2 * Fp * Fp * 2 + 2 * Fp * 4) + Np * Fp * 4)

    grid_spec = pltpu.PrefetchScalarGridSpec(
        num_scalar_prefetch=2,                    # src, dst indices -> SMEM before grid
        grid=(L,),                                # sequential layer axis
        in_specs=[
            pl.BlockSpec(memory_space=pltpu.MemorySpace.SMEM),          # (1+eps) per layer
            pl.BlockSpec((Np, Fp), lambda l, s, d: (0, 0)),             # x (resident)
            pl.BlockSpec((E, Fp), lambda l, s, d: (0, 0)),              # edge_attr (resident)
            pl.BlockSpec((1, Fp, Fp), lambda l, s, d: (l, 0, 0)),       # w1[l] streamed
            pl.BlockSpec((1, 1, Fp), lambda l, s, d: (l, 0, 0)),        # b1[l]
            pl.BlockSpec((1, Fp, Fp), lambda l, s, d: (l, 0, 0)),       # w2[l] (BN folded)
            pl.BlockSpec((1, 1, Fp), lambda l, s, d: (l, 0, 0)),        # b2[l] (BN folded)
        ],
        out_specs=pl.BlockSpec((Np, Fp), lambda l, s, d: (0, 0)),
        scratch_shapes=[pltpu.VMEM((Np, Fp), jnp.float32),              # residual stream x
                        pltpu.VMEM((Np, Fp), jnp.float32)],             # agg accumulator
    )

    out = pl.pallas_call(
        _gnn_kernel,
        grid_spec=grid_spec,
        out_shape=jax.ShapeDtypeStruct((Np, Fp), jnp.float32),
        compiler_params=pltpu.CompilerParams(
            dimension_semantics=("arbitrary",),       # layer axis is sequential
            vmem_limit_bytes=vmem_limit),
        cost_estimate=pl.CostEstimate(flops=flops, transcendentals=0,
                                      bytes_accessed=bytes_accessed),
    )(src_i, dst_i, one_plus_eps, xp, eap, w1p, b1p, w2p, b2p)
    return out[:N, :F]


def base_gnn_reference_bf16(x, edge_attr, src, dst, eps, w1, b1, w2, b2,
                            bn_scale, bn_shift):
    """Reference matching the kernel's numerics (exact f32 gather/scatter, bf16-operand
    f32-accumulate MLP matmuls, BN folded into the second Linear)."""
    L = w1.shape[0]
    N = x.shape[0]
    w2f = w2 * bn_scale
    b2f = b2 * bn_scale + bn_shift
    w1b = w1.astype(jnp.bfloat16)
    w2b = w2f.astype(jnp.bfloat16)
    for l in range(L):
        msg = jnp.maximum(x[src] + edge_attr, 0.0)
        agg = jax.ops.segment_sum(msg, dst, num_segments=N)
        h = (1.0 + eps[l]) * x + agg
        h = jnp.maximum(
            jnp.dot(h.astype(jnp.bfloat16), w1b[l], preferred_element_type=jnp.float32)
            + b1[l], 0.0)
        h = jnp.dot(h.astype(jnp.bfloat16), w2b[l],
                    preferred_element_type=jnp.float32) + b2f[l]
        x = h + x
    return jnp.maximum(x, 0.0)


def base_gnn_reference_f32(x, edge_attr, src, dst, eps, w1, b1, w2, b2,
                           bn_scale, bn_shift):
    """Exact-f32 module semantics (BN applied separately)."""
    L = w1.shape[0]
    N = x.shape[0]
    hi = jax.lax.Precision.HIGHEST
    for l in range(L):
        msg = jnp.maximum(x[src] + edge_attr, 0.0)
        agg = jax.ops.segment_sum(msg, dst, num_segments=N)
        h = (1.0 + eps[l]) * x + agg
        h = jnp.maximum(jnp.dot(h, w1[l], precision=hi) + b1[l], 0.0)
        h = jnp.dot(h, w2[l], precision=hi) + b2[l]
        h = h * bn_scale[l] + bn_shift[l]
        x = h + x
    return jnp.maximum(x, 0.0)


if __name__ == "__main__":
    # Small, deterministic problem sizes: nodes, features (nin), edges, nlayer.
    N, F, E, L = 16, 32, 48, 2

    key = jax.random.PRNGKey(0)
    keys = jax.random.split(key, 12)

    x = jax.random.normal(keys[0], (N, F), dtype=jnp.float32)
    edge_attr = jax.random.normal(keys[1], (E, F), dtype=jnp.float32) * 0.5

    src = jax.random.randint(keys[2], (E,), 0, N)     # edge source nodes
    dst = jax.random.randint(keys[3], (E,), 0, N)     # edge destination nodes

    # GINEConv per-layer eps (train_eps-style learnable scalar).
    eps = (0.05 * jnp.arange(L, dtype=jnp.float32)).reshape(L, 1, 1)

    # GIN MLP weights: Linear(F,F) -> ReLU -> Linear(F,F), bias=True.
    w1 = jax.random.normal(keys[4], (L, F, F), dtype=jnp.float32) * (1.0 / np.sqrt(F))
    b1 = jax.random.normal(keys[5], (L, 1, F), dtype=jnp.float32) * 0.01
    w2 = jax.random.normal(keys[6], (L, F, F), dtype=jnp.float32) * (1.0 / np.sqrt(F))
    b2 = jax.random.normal(keys[7], (L, 1, F), dtype=jnp.float32) * 0.01

    # BatchNorm1d params + running stats (eval mode), folded into scale/shift.
    gamma = 1.0 + 0.1 * jax.random.normal(keys[8], (L, 1, F), dtype=jnp.float32)
    beta = 0.1 * jax.random.normal(keys[9], (L, 1, F), dtype=jnp.float32)
    run_mean = 0.1 * jax.random.normal(keys[10], (L, 1, F), dtype=jnp.float32)
    run_var = 0.5 + jax.random.uniform(keys[11], (L, 1, F), dtype=jnp.float32)
    bn_eps = 1e-5
    bn_scale = gamma / jnp.sqrt(run_var + bn_eps)
    bn_shift = beta - run_mean * bn_scale

    out = base_gnn_pallas(x, edge_attr, src, dst, eps, w1, b1, w2, b2,
                          bn_scale, bn_shift)
    out = jax.block_until_ready(out)

    # Tight check vs a reference with matching numerics (exact f32 gather/scatter,
    # bf16-operand matmuls, BN fold).
    ref_bf16 = base_gnn_reference_bf16(x, edge_attr, src, dst, eps, w1, b1, w2, b2,
                                       bn_scale, bn_shift)
    np.testing.assert_allclose(np.asarray(out), np.asarray(ref_bf16),
                               rtol=1e-4, atol=1e-4)

    # Loose sanity check vs exact-f32 module semantics.
    ref_f32 = base_gnn_reference_f32(x, edge_attr, src, dst, eps, w1, b1, w2, b2,
                                     bn_scale, bn_shift)
    np.testing.assert_allclose(np.asarray(out), np.asarray(ref_f32),
                               rtol=1e-1, atol=1e-1)

    print("KERNEL_OK")
</pallas_src>

<mosaic_0001>
module attributes {stable_mosaic.version = 11 : i64} {
  func.func @_gnn_kernel(%arg0: i32, %arg1: memref<48xi32, #tpu.memory_space<smem>>, %arg2: memref<48xi32, #tpu.memory_space<smem>>, %arg3: memref<2xf32, #tpu.memory_space<smem>>, %arg4: memref<16x128xf32, #tpu.memory_space<vmem>>, %arg5: memref<48x128xf32, #tpu.memory_space<vmem>>, %arg6: memref<1x128x128xbf16, #tpu.memory_space<vmem>>, %arg7: memref<1x1x128xf32, #tpu.memory_space<vmem>>, %arg8: memref<1x128x128xbf16, #tpu.memory_space<vmem>>, %arg9: memref<1x1x128xf32, #tpu.memory_space<vmem>>, %arg10: memref<16x128xf32, #tpu.memory_space<vmem>>, %arg11: memref<16x128xf32, #tpu.memory_space<vmem>>, %arg12: memref<16x128xf32, #tpu.memory_space<vmem>>) attributes {dimension_semantics = [#tpu.dimension_semantics<arbitrary>], iteration_bounds = array<i64: 2>, scalar_prefetch = 2 : i64, scratch_operands = 2 : i64, tpu.core_type = #tpu.core_type<tc>, window_params = [{transform_indices = @transform_0, window_bounds = array<i64: 2>}, {pipeline_mode = #tpu.pipeline_mode<synchronous>, transform_indices = @transform_1, window_bounds = array<i64: 16, 128>}, {pipeline_mode = #tpu.pipeline_mode<synchronous>, transform_indices = @transform_2, window_bounds = array<i64: 48, 128>}, {transform_indices = @transform_3, window_bounds = array<i64: 1, 128, 128>}, {transform_indices = @transform_4, window_bounds = array<i64: 1, 1, 128>}, {transform_indices = @transform_5, window_bounds = array<i64: 1, 128, 128>}, {transform_indices = @transform_6, window_bounds = array<i64: 1, 1, 128>}, {pipeline_mode = #tpu.pipeline_mode<synchronous>, transform_indices = @transform_7, window_bounds = array<i64: 16, 128>}]} {
    %c0_i32 = arith.constant 0 : i32
    %0 = arith.cmpi eq, %arg0, %c0_i32 : i32
    %1 = arith.extui %0 : i1 to i32
    %c0_i32_0 = arith.constant 0 : i32
    %2 = arith.cmpi ne, %1, %c0_i32_0 : i32
    scf.if %2 {
      %c0_27 = arith.constant 0 : index
      %c0_28 = arith.constant 0 : index
      %36 = vector.load %arg4[%c0_27, %c0_28] : memref<16x128xf32, #tpu.memory_space<vmem>>, vector<16x128xf32>
      %c0_29 = arith.constant 0 : index
      %c0_30 = arith.constant 0 : index
      %37 = vector.load %arg11[%c0_29, %c0_30] : memref<16x128xf32, #tpu.memory_space<vmem>>, vector<16x128xf32>
      tpu.vector_store %arg11[%c0_29, %c0_30], %36 {strides = array<i32>} : memref<16x128xf32, #tpu.memory_space<vmem>>, vector<16x128xf32>,
    } else {
    }
    %cst = arith.constant 0.000000e+00 : f32
    %3 = vector.broadcast %cst : f32 to vector<16x128xf32>
    %c0 = arith.constant 0 : index
    %c0_1 = arith.constant 0 : index
    %4 = vector.load %arg12[%c0, %c0_1] : memref<16x128xf32, #tpu.memory_space<vmem>>, vector<16x128xf32>
    tpu.vector_store %arg12[%c0, %c0_1], %3 {strides = array<i32>} : memref<16x128xf32, #tpu.memory_space<vmem>>, vector<16x128xf32>,
    %c0_i32_2 = arith.constant 0 : i32
    %c48_i32 = arith.constant 48 : i32
    %5 = arith.addi %c0_i32_2, %c48_i32 : i32
    %c1_i32 = arith.constant 1 : i32
    scf.for %arg13 = %c0_i32_2 to %5 step %c1_i32  : i32 {
      %36 = arith.index_cast %arg13 : i32 to index
      %37 = memref.load %arg1[%36] : memref<48xi32, #tpu.memory_space<smem>>
      %38 = arith.index_cast %arg13 : i32 to index
      %39 = memref.load %arg2[%38] : memref<48xi32, #tpu.memory_space<smem>>
      %40 = arith.index_cast %37 : i32 to index
      %c0_27 = arith.constant 0 : index
      %41 = vector.load %arg11[%40, %c0_27] : memref<16x128xf32, #tpu.memory_space<vmem>>, vector<1x128xf32>
      %42 = arith.index_cast %arg13 : i32 to index
      %c0_28 = arith.constant 0 : index
      %43 = vector.load %arg5[%42, %c0_28] : memref<48x128xf32, #tpu.memory_space<vmem>>, vector<1x128xf32>
      %44 = arith.addf %41, %43 : vector<1x128xf32>
      %cst_29 = arith.constant 0.000000e+00 : f32
      %45 = vector.broadcast %cst_29 : f32 to vector<1x128xf32>
      %46 = arith.maximumf %44, %45 : vector<1x128xf32>
      %47 = arith.index_cast %39 : i32 to index
      %c0_30 = arith.constant 0 : index
      %48 = vector.load %arg12[%47, %c0_30] : memref<16x128xf32, #tpu.memory_space<vmem>>, vector<1x128xf32>
      %49 = arith.addf %48, %46 : vector<1x128xf32>
      %50 = arith.index_cast %39 : i32 to index
      %c0_31 = arith.constant 0 : index
      %51 = vector.load %arg12[%50, %c0_31] : memref<16x128xf32, #tpu.memory_space<vmem>>, vector<1x128xf32>
      tpu.vector_store %arg12[%50, %c0_31], %49 {strides = array<i32>} : memref<16x128xf32, #tpu.memory_space<vmem>>, vector<1x128xf32>,
    }
    %c48_i32_3 = arith.constant 48 : i32
    %c0_4 = arith.constant 0 : index
    %c0_5 = arith.constant 0 : index
    %6 = vector.load %arg11[%c0_4, %c0_5] : memref<16x128xf32, #tpu.memory_space<vmem>>, vector<16x128xf32>
    %7 = arith.index_cast %arg0 : i32 to index
    %8 = memref.load %arg3[%7] : memref<2xf32, #tpu.memory_space<smem>>
    %9 = vector.broadcast %8 : f32 to vector<16x128xf32>
    %10 = arith.mulf %9, %6 : vector<16x128xf32>
    %c0_6 = arith.constant 0 : index
    %c0_7 = arith.constant 0 : index
    %11 = vector.load %arg12[%c0_6, %c0_7] : memref<16x128xf32, #tpu.memory_space<vmem>>, vector<16x128xf32>
    %12 = arith.addf %10, %11 : vector<16x128xf32>
    %13 = arith.truncf %12 : vector<16x128xf32> to vector<16x128xbf16>
    %c0_8 = arith.constant 0 : index
    %c0_9 = arith.constant 0 : index
    %c0_10 = arith.constant 0 : index
    %14 = vector.load %arg6[%c0_8, %c0_9, %c0_10] : memref<1x128x128xbf16, #tpu.memory_space<vmem>>, vector<1x128x128xbf16>
    %15 = vector.shape_cast %14 : vector<1x128x128xbf16> to vector<128x128xbf16>
    %cst_11 = arith.constant dense<0.000000e+00> : vector<16x128xf32>
    %16 = tpu.matmul %13, %15, %cst_11 {dimension_numbers = #tpu.dot_dimension_numbers<[1], [0], [0], [1], [0, 0, 1, 1], [], []>} : vector<16x128xbf16>, vector<128x128xbf16>, vector<16x128xf32> -> vector<16x128xf32>
    %c0_12 = arith.constant 0 : index
    %c0_13 = arith.constant 0 : index
    %c0_14 = arith.constant 0 : index
    %17 = vector.load %arg7[%c0_12, %c0_13, %c0_14] : memref<1x1x128xf32, #tpu.memory_space<vmem>>, vector<1x1x128xf32>
    %18 = vector.shape_cast %17 : vector<1x1x128xf32> to vector<1x128xf32>
    %19 = vector.broadcast %18 : vector<1x128xf32> to vector<16x128xf32>
    %20 = arith.addf %16, %19 : vector<16x128xf32>
    %cst_15 = arith.constant 0.000000e+00 : f32
    %21 = vector.broadcast %cst_15 : f32 to vector<16x128xf32>
    %22 = arith.maximumf %20, %21 : vector<16x128xf32>
    %23 = arith.truncf %22 : vector<16x128xf32> to vector<16x128xbf16>
    %c0_16 = arith.constant 0 : index
    %c0_17 = arith.constant 0 : index
    %c0_18 = arith.constant 0 : index
    %24 = vector.load %arg8[%c0_16, %c0_17, %c0_18] : memref<1x128x128xbf16, #tpu.memory_space<vmem>>, vector<1x128x128xbf16>
    %25 = vector.shape_cast %24 : vector<1x128x128xbf16> to vector<128x128xbf16>
    %cst_19 = arith.constant dense<0.000000e+00> : vector<16x128xf32>
    %26 = tpu.matmul %23, %25, %cst_19 {dimension_numbers = #tpu.dot_dimension_numbers<[1], [0], [0], [1], [0, 0, 1, 1], [], []>} : vector<16x128xbf16>, vector<128x128xbf16>, vector<16x128xf32> -> vector<16x128xf32>
    %c0_20 = arith.constant 0 : index
    %c0_21 = arith.constant 0 : index
    %c0_22 = arith.constant 0 : index
    %27 = vector.load %arg9[%c0_20, %c0_21, %c0_22] : memref<1x1x128xf32, #tpu.memory_space<vmem>>, vector<1x1x128xf32>
    %28 = vector.shape_cast %27 : vector<1x1x128xf32> to vector<1x128xf32>
    %29 = vector.broadcast %28 : vector<1x128xf32> to vector<16x128xf32>
    %30 = arith.addf %26, %29 : vector<16x128xf32>
    %31 = arith.addf %30, %6 : vector<16x128xf32>
    %c0_23 = arith.constant 0 : index
    %c0_24 = arith.constant 0 : index
    %32 = vector.load %arg11[%c0_23, %c0_24] : memref<16x128xf32, #tpu.memory_space<vmem>>, vector<16x128xf32>
    tpu.vector_store %arg11[%c0_23, %c0_24], %31 {strides = array<i32>} : memref<16x128xf32, #tpu.memory_space<vmem>>, vector<16x128xf32>,
    %c1_i32_25 = arith.constant 1 : i32
    %33 = arith.cmpi eq, %arg0, %c1_i32_25 : i32
    %34 = arith.extui %33 : i1 to i32
    %c0_i32_26 = arith.constant 0 : i32
    %35 = arith.cmpi ne, %34, %c0_i32_26 : i32
    scf.if %35 {
      %cst_27 = arith.constant 0.000000e+00 : f32
      %36 = vector.broadcast %cst_27 : f32 to vector<16x128xf32>
      %37 = arith.maximumf %31, %36 : vector<16x128xf32>
      %c0_28 = arith.constant 0 : index
      %c0_29 = arith.constant 0 : index
      %38 = vector.load %arg10[%c0_28, %c0_29] : memref<16x128xf32, #tpu.memory_space<vmem>>, vector<16x128xf32>
      tpu.vector_store %arg10[%c0_28, %c0_29], %37 {strides = array<i32>} : memref<16x128xf32, #tpu.memory_space<vmem>>, vector<16x128xf32>,
    } else {
    }
    return
  }
  func.func @transform_0(%arg0: i32, %arg1: memref<48xi32, #tpu.memory_space<smem>>, %arg2: memref<48xi32, #tpu.memory_space<smem>>) -> i32 {
    %c0_i32 = arith.constant 0 : i32
    %c0_i32_0 = arith.constant 0 : i32
    return %c0_i32 : i32
  }
  func.func @transform_1(%arg0: i32, %arg1: memref<48xi32, #tpu.memory_space<smem>>, %arg2: memref<48xi32, #tpu.memory_space<smem>>) -> (i32, i32) {
    %c0_i32 = arith.constant 0 : i32
    %c0_i32_0 = arith.constant 0 : i32
    %c0_i32_1 = arith.constant 0 : i32
    return %c0_i32, %c0_i32_0 : i32, i32
  }
  func.func @transform_2(%arg0: i32, %arg1: memref<48xi32, #tpu.memory_space<smem>>, %arg2: memref<48xi32, #tpu.memory_space<smem>>) -> (i32, i32) {
    %c0_i32 = arith.constant 0 : i32
    %c0_i32_0 = arith.constant 0 : i32
    %c0_i32_1 = arith.constant 0 : i32
    return %c0_i32, %c0_i32_0 : i32, i32
  }
  func.func @transform_3(%arg0: i32, %arg1: memref<48xi32, #tpu.memory_space<smem>>, %arg2: memref<48xi32, #tpu.memory_space<smem>>) -> (i32, i32, i32) {
    %c0_i32 = arith.constant 0 : i32
    %c0_i32_0 = arith.constant 0 : i32
    %c0_i32_1 = arith.constant 0 : i32
    return %arg0, %c0_i32, %c0_i32_0 : i32, i32, i32
  }
  func.func @transform_4(%arg0: i32, %arg1: memref<48xi32, #tpu.memory_space<smem>>, %arg2: memref<48xi32, #tpu.memory_space<smem>>) -> (i32, i32, i32) {
    %c0_i32 = arith.constant 0 : i32
    %c0_i32_0 = arith.constant 0 : i32
    %c0_i32_1 = arith.constant 0 : i32
    return %arg0, %c0_i32, %c0_i32_0 : i32, i32, i32
  }
  func.func @transform_5(%arg0: i32, %arg1: memref<48xi32, #tpu.memory_space<smem>>, %arg2: memref<48xi32, #tpu.memory_space<smem>>) -> (i32, i32, i32) {
    %c0_i32 = arith.constant 0 : i32
    %c0_i32_0 = arith.constant 0 : i32
    %c0_i32_1 = arith.constant 0 : i32
    return %arg0, %c0_i32, %c0_i32_0 : i32, i32, i32
  }
  func.func @transform_6(%arg0: i32, %arg1: memref<48xi32, #tpu.memory_space<smem>>, %arg2: memref<48xi32, #tpu.memory_space<smem>>) -> (i32, i32, i32) {
    %c0_i32 = arith.constant 0 : i32
    %c0_i32_0 = arith.constant 0 : i32
    %c0_i32_1 = arith.constant 0 : i32
    return %arg0, %c0_i32, %c0_i32_0 : i32, i32, i32
  }
  func.func @transform_7(%arg0: i32, %arg1: memref<48xi32, #tpu.memory_space<smem>>, %arg2: memref<48xi32, #tpu.memory_space<smem>>) -> (i32, i32) {
    %c0_i32 = arith.constant 0 : i32
    %c0_i32_0 = arith.constant 0 : i32
    %c0_i32_1 = arith.constant 0 : i32
    return %c0_i32, %c0_i32_0 : i32, i32
  }
}

</mosaic_0001>

<llo_original>
// kernel: tpu_custom_call.1
$region0: #{tpu_custom_call.1}
  #allocation0 [shape = 'u32[]', space=smem, size = 0x4, offset = 0x4, fixed_abs, tag = 'smem constant byte address 0x4 - core index']
  #allocation1 [shape = 'u32[144,128]{1,0:T(1,128)}', space=vmem, size = 0x12000, scoped, tag = 'internal scratch']
  #allocation2 [shape = 'f32[16,128]{1,0:T(8,128)}', space=vmem, size = 0x2000, scoped, tag = 'scratch operand']
  #allocation3 [shape = 'f32[16,128]{1,0:T(8,128)}', space=vmem, size = 0x2000, scoped, tag = 'scratch operand']
  #allocation4 [shape = 's32[1]{0}', space=sflag, size = 0x4, scoped, tag = 'scoped memory for tpu_custom_call.1']
  #allocation5 [shape = 'u8[512]{0}', space=smem, size = 0x200, scoped, tag = 'prefetched SMEM operand 0']
  #allocation6 [shape = 'u8[512]{0}', space=smem, size = 0x200, scoped, tag = 'prefetched SMEM operand 1']
  %s0 = inlined_call_operand.hbm [shape: s32[48], index: 0, kind: input, shape index: {}]
  %s1 = inlined_call_operand.vmem [shape: s32[48], index: 1, kind: input, shape index: {}]
  %s2 = inlined_call_operand.vmem [shape: f32[2], index: 2, kind: input, shape index: {}]
  %s3 = inlined_call_operand.hbm [shape: f32[16,128], index: 3, kind: input, shape index: {}]
  %s4 = inlined_call_operand.hbm [shape: f32[48,128], index: 4, kind: input, shape index: {}]
  %s5 = inlined_call_operand.hbm [shape: bf16[2,128,128], index: 5, kind: input, shape index: {}]
  %s6 = inlined_call_operand.vmem [shape: f32[2,1,128], index: 6, kind: input, shape index: {}]
  %s7 = inlined_call_operand.hbm [shape: bf16[2,128,128], index: 7, kind: input, shape index: {}]
  %s8 = inlined_call_operand.vmem [shape: f32[2,1,128], index: 8, kind: input, shape index: {}]
  %s9 = inlined_call_operand.hbm [shape: f32[16,128], index: 9, kind: output, shape index: {}]
  %s10 = sld [smem:[#allocation0]]
  $region96: #{tpu_custom_call.1} parent=0
    _
  %s12 = ssub.s32 1, %s10
  %s13 = scalar_select 0, %s12, %s10
  %15 = dma.hbm_to_smem %s0, 16, [#allocation5], [#allocation4]
  %s16 = sshll.u32 %s1, 4
  %s17 = int_to_ptr.vmem [resolvable:$true] %s16
  %19 = dma.vmem_to_smem %s17, 16, [#allocation6], [#allocation4]
  %20 = dma.done [#allocation4], 32
  %21 = sfence
  $region1: #{tpu_custom_call.1} parent=0
    #allocation7 [shape = 'u8[512]{0}', space=smem, size = 0x200, scoped, tag = 'input window, operand 2, single buffered']
    #allocation8 [shape = 's32[2]{0}', space=sflag, size = 0x8, scoped, tag = 'scoped memory for tpu_custom_call.1']
    #allocation9 [shape = 's32[2]{0}', space=sflag, size = 0x8, scoped, tag = 'scoped memory for tpu_custom_call.1']
    #allocation10 [shape = 's32[2]{0}', space=sflag, size = 0x8, scoped, tag = 'scoped memory for tpu_custom_call.1']
    #allocation11 [shape = 'u8[8192]{0}', space=vmem, size = 0x2000, scoped, tag = 'input window, operand 3, single buffered']
    #allocation12 [shape = 'u8[24576]{0}', space=vmem, size = 0x6000, scoped, tag = 'input window, operand 4, single buffered']
    #allocation13 [shape = 's32[1]{0}', space=sflag, size = 0x4, scoped, tag = 'scoped memory for tpu_custom_call.1']
    #allocation14 [shape = 'u8[65536]{0}', space=vmem, size = 0x10000, scoped, tag = 'input window, operand 5']
    #allocation15 [shape = 'u8[65536]{0}', space=vmem, size = 0x10000, scoped, tag = 'input window, operand 7']
    #allocation16 [shape = 'u8[8192]{0}', space=vmem, size = 0x2000, scoped, tag = 'output window, operand 0, single buffered']
    %22 = vsyncpa [#allocation10], 0
    %23 = vsyncpa [#allocation8], 0
    %24 = vsyncpa [#allocation13], 0
    %25 = vsyncpa [#allocation9], 0
    loop: start=0, step=1, limit=4
    $region2: #{tpu_custom_call.1} parent=1 // loop_pre_header
      _
    $region3: #{tpu_custom_call.1} parent=1 // loop_header
      %s27 = sphi 0, %s31
      %p28 = scmp.ge.s32.totalorder %s27, 4
      %s35 = sphi 0, %s35
      %s37 = sphi 0, %s35
      %s38 = sphi 0, %s37
      %s52 = sphi 0, %s38
      %s56 = sphi 0, %s56
      %s58 = sphi 0, %s56
      %s59 = sphi 0, %s58
      %s73 = sphi 0, %s59
      %s77 = sphi 0, %s77
      %s79 = sphi 0, %s77
      %s80 = sphi 0, %s79
      %s94 = sphi 0, %s80
      %s100 = sphi 0, %s102
      %s103 = sphi 0, %s100
      %s104 = sphi 0, %s103
      %s120 = sphi 0, %s104
      %s126 = sphi 0, %s128
      %s129 = sphi 0, %s126
      %s130 = sphi 0, %s129
      %s146 = sphi 0, %s130
      %s152 = sphi 0, %s154
      %s155 = sphi 0, %s152
      %s156 = sphi 0, %s155
      %s172 = sphi 0, %s156
      %s178 = sphi 0, %s180
      %s181 = sphi 0, %s178
      %s182 = sphi 0, %s181
      %s198 = sphi 0, %s182
      %s202 = sphi 0, %s202
      %s204 = sphi 0, %s202
      %s205 = sphi 0, %s204
      %s219 = sphi 0, %s205
    $region4: #{tpu_custom_call.1} parent=1 // loop_header_branch
      %30 = sbr.rel (%p28) target = $region8
    $region5: #{tpu_custom_call.1} parent=1 // loop_body
      %s32 = ssub.s32 %s27, 1
      %s33 = ssub.s32 %s27, 2
      %s34 = sadd.s32 %s27, 1
      %s36 = sadd.s32 %s35, 1
      %p39 = scmp.eq.s32.totalorder %s27, 1
      %p40 = scmp.ne.s32.totalorder %s35, %s37
      %p41 = scmp.eq.s32.totalorder %s27, 0
      %p42 = por %p40, %p41
      %p43 = scmp.ne.s32.totalorder %s35, %s37
      %p44 = scmp.eq.s32.totalorder %s32, 1
      %p45 = por %p43, %p44
      %p46 = scmp.ne.s32.totalorder %s37, %s38
      %p47 = scmp.eq.s32.totalorder %s32, 0
      %p48 = por %p46, %p47
      %p49 = scmp.ne.s32.totalorder %s37, %s38
      %p50 = scmp.eq.s32.totalorder %s33, 1
      %p51 = por %p49, %p50
      %p53 = scmp.ne.s32.totalorder %s38, %s52
      %p54 = scmp.eq.s32.totalorder %s33, 0
      %p55 = por %p53, %p54
      %s57 = sadd.s32 %s56, 1
      %p60 = scmp.eq.s32.totalorder %s27, 1
      %p61 = scmp.ne.s32.totalorder %s56, %s58
      %p62 = scmp.eq.s32.totalorder %s27, 0
      %p63 = por %p61, %p62
      %p64 = scmp.ne.s32.totalorder %s56, %s58
      %p65 = scmp.eq.s32.totalorder %s32, 1
      %p66 = por %p64, %p65
      %p67 = scmp.ne.s32.totalorder %s58, %s59
      %p68 = scmp.eq.s32.totalorder %s32, 0
      %p69 = por %p67, %p68
      %p70 = scmp.ne.s32.totalorder %s58, %s59
      %p71 = scmp.eq.s32.totalorder %s33, 1
      %p72 = por %p70, %p71
      %p74 = scmp.ne.s32.totalorder %s59, %s73
      %p75 = scmp.eq.s32.totalorder %s33, 0
      %p76 = por %p74, %p75
      %s78 = sadd.s32 %s77, 1
      %p81 = scmp.eq.s32.totalorder %s27, 1
      %p82 = scmp.ne.s32.totalorder %s77, %s79
      %p83 = scmp.eq.s32.totalorder %s27, 0
      %p84 = por %p82, %p83
      %p85 = scmp.ne.s32.totalorder %s77, %s79
      %p86 = scmp.eq.s32.totalorder %s32, 1
      %p87 = por %p85, %p86
      %p88 = scmp.ne.s32.totalorder %s79, %s80
      %p89 = scmp.eq.s32.totalorder %s32, 0
      %p90 = por %p88, %p89
      %p91 = scmp.ne.s32.totalorder %s79, %s80
      %p92 = scmp.eq.s32.totalorder %s33, 1
      %p93 = por %p91, %p92
      %p95 = scmp.ne.s32.totalorder %s80, %s94
      %p96 = scmp.eq.s32.totalorder %s33, 0
      %p97 = por %p95, %p96
      %s98 = ssub.s32 %s27, %s34
      %p99 = scmp.eq.s32.totalorder %s98, 0
      %s101 = sadd.s32 %s100, 1
      %s102 = scalar_select %p99, %s100, %s101
      %p105 = pneg %p99
      %p106 = scmp.eq.s32.totalorder %s27, 1
      %p107 = por %p105, %p106
      %p108 = scmp.ne.s32.totalorder %s100, %s103
      %p109 = scmp.eq.s32.totalorder %s27, 0
      %p110 = por %p108, %p109
      %p111 = scmp.ne.s32.totalorder %s100, %s103
      %p112 = scmp.eq.s32.totalorder %s32, 1
      %p113 = por %p111, %p112
      %p114 = scmp.ne.s32.totalorder %s103, %s104
      %p115 = scmp.eq.s32.totalorder %s32, 0
      %p116 = por %p114, %p115
      %p117 = scmp.ne.s32.totalorder %s103, %s104
      %p118 = scmp.eq.s32.totalorder %s33, 1
      %p119 = por %p117, %p118
      %p121 = scmp.ne.s32.totalorder %s104, %s120
      %p122 = scmp.eq.s32.totalorder %s33, 0
      %p123 = por %p121, %p122
      %s124 = ssub.s32 %s27, %s34
      %p125 = scmp.eq.s32.totalorder %s124, 0
      %s127 = sadd.s32 %s126, 1
      %s128 = scalar_select %p125, %s126, %s127
      %p131 = pneg %p125
      %p132 = scmp.eq.s32.totalorder %s27, 1
      %p133 = por %p131, %p132
      %p134 = scmp.ne.s32.totalorder %s126, %s129
      %p135 = scmp.eq.s32.totalorder %s27, 0
      %p136 = por %p134, %p135
      %p137 = scmp.ne.s32.totalorder %s126, %s129
      %p138 = scmp.eq.s32.totalorder %s32, 1
      %p139 = por %p137, %p138
      %p140 = scmp.ne.s32.totalorder %s129, %s130
      %p141 = scmp.eq.s32.totalorder %s32, 0
      %p142 = por %p140, %p141
      %p143 = scmp.ne.s32.totalorder %s129, %s130
      %p144 = scmp.eq.s32.totalorder %s33, 1
      %p145 = por %p143, %p144
      %p147 = scmp.ne.s32.totalorder %s130, %s146
      %p148 = scmp.eq.s32.totalorder %s33, 0
      %p149 = por %p147, %p148
      %s150 = ssub.s32 %s27, %s34
      %p151 = scmp.eq.s32.totalorder %s150, 0
      %s153 = sadd.s32 %s152, 1
      %s154 = scalar_select %p151, %s152, %s153
      %p157 = pneg %p151
      %p158 = scmp.eq.s32.totalorder %s27, 1
      %p159 = por %p157, %p158
      %p160 = scmp.ne.s32.totalorder %s152, %s155
      %p161 = scmp.eq.s32.totalorder %s27, 0
      %p162 = por %p160, %p161
      %p163 = scmp.ne.s32.totalorder %s152, %s155
      %p164 = scmp.eq.s32.totalorder %s32, 1
      %p165 = por %p163, %p164
      %p166 = scmp.ne.s32.totalorder %s155, %s156
      %p167 = scmp.eq.s32.totalorder %s32, 0
      %p168 = por %p166, %p167
      %p169 = scmp.ne.s32.totalorder %s155, %s156
      %p170 = scmp.eq.s32.totalorder %s33, 1
      %p171 = por %p169, %p170
      %p173 = scmp.ne.s32.totalorder %s156, %s172
      %p174 = scmp.eq.s32.totalorder %s33, 0
      %p175 = por %p173, %p174
      %s176 = ssub.s32 %s27, %s34
      %p177 = scmp.eq.s32.totalorder %s176, 0
      %s179 = sadd.s32 %s178, 1
      %s180 = scalar_select %p177, %s178, %s179
      %p183 = pneg %p177
      %p184 = scmp.eq.s32.totalorder %s27, 1
      %p185 = por %p183, %p184
      %p186 = scmp.ne.s32.totalorder %s178, %s181
      %p187 = scmp.eq.s32.totalorder %s27, 0
      %p188 = por %p186, %p187
      %p189 = scmp.ne.s32.totalorder %s178, %s181
      %p190 = scmp.eq.s32.totalorder %s32, 1
      %p191 = por %p189, %p190
      %p192 = scmp.ne.s32.totalorder %s181, %s182
      %p193 = scmp.eq.s32.totalorder %s32, 0
      %p194 = por %p192, %p193
      %p195 = scmp.ne.s32.totalorder %s181, %s182
      %p196 = scmp.eq.s32.totalorder %s33, 1
      %p197 = por %p195, %p196
      %p199 = scmp.ne.s32.totalorder %s182, %s198
      %p200 = scmp.eq.s32.totalorder %s33, 0
      %p201 = por %p199, %p200
      %s203 = sadd.s32 %s202, 1
      %p206 = scmp.eq.s32.totalorder %s27, 1
      %p207 = scmp.ne.s32.totalorder %s202, %s204
      %p208 = scmp.eq.s32.totalorder %s27, 0
      %p209 = por %p207, %p208
      %p210 = scmp.ne.s32.totalorder %s202, %s204
      %p211 = scmp.eq.s32.totalorder %s32, 1
      %p212 = por %p210, %p211
      %p213 = scmp.ne.s32.totalorder %s204, %s205
      %p214 = scmp.eq.s32.totalorder %s32, 0
      %p215 = por %p213, %p214
      %p216 = scmp.ne.s32.totalorder %s204, %s205
      %p217 = scmp.eq.s32.totalorder %s33, 1
      %p218 = por %p216, %p217
      %p220 = scmp.ne.s32.totalorder %s205, %s219
      %p221 = scmp.eq.s32.totalorder %s33, 0
      %p222 = por %p220, %p221
      %p223 = scmp.le.s32.totalorder 1, %s27
      %p224 = scmp.lt.s32.totalorder %s27, 3
      %p225 = pnand %p223, %p224
      %p226 = pneg %p225
      // Predicated region
      $region9: #{tpu_custom_call.1} parent=5 // pred_check
        _
      $region10: #{tpu_custom_call.1} parent=5 // pred_check_branch
        %228 = sbr.rel (%p225) target = $region12
      $region11: #{tpu_custom_call.1} parent=5 // pred_region
        %s229 = ssub.s32 %s27, 1
        // Predicated region
        $region13: #{tpu_custom_call.1} parent=11 // pred_check
          %p230 = pneg %p48
        $region14: #{tpu_custom_call.1} parent=11 // pred_check_branch
          %232 = sbr.rel (%p230) target = $region16
        $region15: #{tpu_custom_call.1} parent=11 // pred_region
          %s234 = ssub.s32 16, 16
          %235 = vsyncadd [#allocation10], %s234
          %s237 = sshll.u32 %s2, 4
          %s238 = int_to_ptr.vmem [resolvable:$true] %s237
          %240 = dma.vmem_to_smem %s238, 16, [#allocation7], [#allocation10]
        $region16: #{tpu_custom_call.1} parent=11 // pred_fallthru
          _
        // Predicated region
        $region17: #{tpu_custom_call.1} parent=11 // pred_check
          %p241 = pneg %p69
        $region18: #{tpu_custom_call.1} parent=11 // pred_check_branch
          %243 = sbr.rel (%p241) target = $region20
        $region19: #{tpu_custom_call.1} parent=11 // pred_region
          %s245 = ssub.s32 256, 256
          %246 = vsyncadd [#allocation8], %s245
          %s247 = sshll.u32 [#allocation11], 4
          %s248 = int_to_ptr.vmem [resolvable:$true] %s247
          %253 = dma.hbm_to_vmem [thread:$0]  %s3, 256, %s248, [#allocation8], 128, 128, 8
        $region20: #{tpu_custom_call.1} parent=11 // pred_fallthru
          _
        // Predicated region
        $region21: #{tpu_custom_call.1} parent=11 // pred_check
          %p254 = pneg %p90
        $region22: #{tpu_custom_call.1} parent=11 // pred_check_branch
          %256 = sbr.rel (%p254) target = $region24
        $region23: #{tpu_custom_call.1} parent=11 // pred_region
          %s258 = ssub.s32 768, 768
          %259 = vsyncadd [#allocation13], %s258
          %s260 = sshll.u32 [#allocation12], 4
          %s261 = int_to_ptr.vmem [resolvable:$true] %s260
          %266 = dma.hbm_to_vmem [thread:$0]  %s4, 768, %s261, [#allocation13], 128, 128, 8
        $region24: #{tpu_custom_call.1} parent=11 // pred_fallthru
          _
      $region12: #{tpu_custom_call.1} parent=5 // pred_fallthru
        _
      %p267 = scmp.lt.s32.totalorder %s27, 2
      // Predicated region
      $region25: #{tpu_custom_call.1} parent=5 // pred_check
        %p268 = pneg %p267
      $region26: #{tpu_custom_call.1} parent=5 // pred_check_branch
        %270 = sbr.rel (%p268) target = $region28
      $region27: #{tpu_custom_call.1} parent=5 // pred_region
        // Predicated region
        $region29: #{tpu_custom_call.1} parent=27 // pred_check
          %p271 = pneg %p110
        $region30: #{tpu_custom_call.1} parent=27 // pred_check_branch
          %273 = sbr.rel (%p271) target = $region32
        $region31: #{tpu_custom_call.1} parent=27 // pred_region
          %s274 = sand.u32 %s27, 1
          %s275 = scalar_lea.sflag [#allocation8], %s274
          %s276 = sand.u32 %s100, 1
          %s277 = smul.addr %s276, 64
          %s278 = scalar_lea.vmem [#allocation14], %s277
          %s280 = ssub.s32 1024, 1024
          %281 = vsyncadd %s275, %s280
          %s282 = smul.addr %s27, 16
          %s283 = smul.addr %s282, 64
          %s284 = scalar_lea.hbm %s5, %s283
          %s285 = sshll.u32 %s278, 4
          %s286 = int_to_ptr.vmem [resolvable:$true] %s285
          %291 = dma.hbm_to_vmem [thread:$0]  %s284, 1024, %s286, %s275, 64, 64, 4
        $region32: #{tpu_custom_call.1} parent=27 // pred_fallthru
          _
        // Predicated region
        $region33: #{tpu_custom_call.1} parent=27 // pred_check
          %p292 = pneg %p136
        $region34: #{tpu_custom_call.1} parent=27 // pred_check_branch
          %294 = sbr.rel (%p292) target = $region36
        $region35: #{tpu_custom_call.1} parent=27 // pred_region
          %p295 = scmp.lt.s32.totalorder %s27, 1
          %s296 = scalar_select %p295, %s27, 1
          %s297 = scalar_lea.vmem %s6, %s296
        $region36: #{tpu_custom_call.1} parent=27 // pred_fallthru
          _
        // Predicated region
        $region37: #{tpu_custom_call.1} parent=27 // pred_check
          %p298 = pneg %p162
        $region38: #{tpu_custom_call.1} parent=27 // pred_check_branch
          %300 = sbr.rel (%p298) target = $region40
        $region39: #{tpu_custom_call.1} parent=27 // pred_region
          %s301 = sand.u32 %s27, 1
          %s302 = scalar_lea.sflag [#allocation8], %s301
          %s303 = sand.u32 %s152, 1
          %s304 = smul.addr %s303, 64
          %s305 = scalar_lea.vmem [#allocation15], %s304
          %s307 = ssub.s32 1024, 1024
          %308 = vsyncadd %s302, %s307
          %s309 = smul.addr %s27, 16
          %s310 = smul.addr %s309, 64
          %s311 = scalar_lea.hbm %s7, %s310
          %s312 = sshll.u32 %s305, 4
          %s313 = int_to_ptr.vmem [resolvable:$true] %s312
          %318 = dma.hbm_to_vmem [thread:$0]  %s311, 1024, %s313, %s302, 64, 64, 4
        $region40: #{tpu_custom_call.1} parent=27 // pred_fallthru
          _
        // Predicated region
        $region41: #{tpu_custom_call.1} parent=27 // pred_check
          %p319 = pneg %p188
        $region42: #{tpu_custom_call.1} parent=27 // pred_check_branch
          %321 = sbr.rel (%p319) target = $region44
        $region43: #{tpu_custom_call.1} parent=27 // pred_region
          %p322 = scmp.lt.s32.totalorder %s27, 1
          %s323 = scalar_select %p322, %s27, 1
          %s324 = scalar_lea.vmem %s8, %s323
        $region44: #{tpu_custom_call.1} parent=27 // pred_fallthru
          _
      $region28: #{tpu_custom_call.1} parent=5 // pred_fallthru
        _
      %p325 = scmp.le.s32.totalorder 1, %s27
      %p326 = scmp.lt.s32.totalorder %s27, 3
      %p327 = pnand %p325, %p326
      %p328 = pneg %p327
      // Predicated region
      $region45: #{tpu_custom_call.1} parent=5 // pred_check
        _
      $region46: #{tpu_custom_call.1} parent=5 // pred_check_branch
        %330 = sbr.rel (%p327) target = $region48
      $region47: #{tpu_custom_call.1} parent=5 // pred_region
        %s331 = ssub.s32 %s27, 1
        // Predicated region
        $region49: #{tpu_custom_call.1} parent=47 // pred_check
          %p332 = pneg %p48
        $region50: #{tpu_custom_call.1} parent=47 // pred_check_branch
          %334 = sbr.rel (%p332) target = $region52
        $region51: #{tpu_custom_call.1} parent=47 // pred_region
          %335 = dma.done [#allocation10], 16
        $region52: #{tpu_custom_call.1} parent=47 // pred_fallthru
          _
        // Predicated region
        $region53: #{tpu_custom_call.1} parent=47 // pred_check
          %p336 = pneg %p69
        $region54: #{tpu_custom_call.1} parent=47 // pred_check_branch
          %338 = sbr.rel (%p336) target = $region56
        $region55: #{tpu_custom_call.1} parent=47 // pred_region
          %339 = dma.done [#allocation8], 256
        $region56: #{tpu_custom_call.1} parent=47 // pred_fallthru
          _
        // Predicated region
        $region57: #{tpu_custom_call.1} parent=47 // pred_check
          %p340 = pneg %p90
        $region58: #{tpu_custom_call.1} parent=47 // pred_check_branch
          %342 = sbr.rel (%p340) target = $region60
        $region59: #{tpu_custom_call.1} parent=47 // pred_region
          %343 = dma.done [#allocation13], 768
        $region60: #{tpu_custom_call.1} parent=47 // pred_fallthru
          _
        %s344 = sand.u32 %s32, 1
        %s345 = scalar_lea.sflag [#allocation8], %s344
        %s346 = sand.u32 %s103, 1
        %s347 = smul.addr %s346, 64
        %s348 = scalar_lea.vmem [#allocation14], %s347
        // Predicated region
        $region61: #{tpu_custom_call.1} parent=47 // pred_check
          %p349 = pneg %p116
        $region62: #{tpu_custom_call.1} parent=47 // pred_check_branch
          %351 = sbr.rel (%p349) target = $region64
        $region63: #{tpu_custom_call.1} parent=47 // pred_region
          %352 = dma.done %s345, 1024
        $region64: #{tpu_custom_call.1} parent=47 // pred_fallthru
          _
        %s353 = sand.u32 %s32, 1
        %s354 = scalar_lea.sflag [#allocation8], %s353
        %s355 = sand.u32 %s155, 1
        %s356 = smul.addr %s355, 64
        %s357 = scalar_lea.vmem [#allocation15], %s356
        // Predicated region
        $region65: #{tpu_custom_call.1} parent=47 // pred_check
          %p358 = pneg %p168
        $region66: #{tpu_custom_call.1} parent=47 // pred_check_branch
          %360 = sbr.rel (%p358) target = $region68
        $region67: #{tpu_custom_call.1} parent=47 // pred_region
          %361 = dma.done %s354, 1024
        $region68: #{tpu_custom_call.1} parent=47 // pred_fallthru
          _
        %362 = sfence
        %p363 = pneg %p48
        %p364 = pneg %p45
        %p365 = pneg %p69
        %p366 = pneg %p66
        %p367 = pneg %p90
        %p368 = pneg %p87
        %s369 = sand.u32 %s32, 1
        %s370 = scalar_lea.sflag [#allocation8], %s369
        %s371 = sand.u32 %s103, 1
        %s372 = smul.addr %s371, 64
        %s373 = scalar_lea.vmem [#allocation14], %s372
        %p374 = pneg %p116
        %p375 = pneg %p113
        %p376 = scmp.lt.s32.totalorder %s32, 1
        %s377 = scalar_select %p376, %s32, 1
        %s378 = scalar_lea.vmem %s6, %s377
        %p379 = pneg %p142
        %p380 = pneg %p139
        %s381 = sand.u32 %s32, 1
        %s382 = scalar_lea.sflag [#allocation8], %s381
        %s383 = sand.u32 %s155, 1
        %s384 = smul.addr %s383, 64
        %s385 = scalar_lea.vmem [#allocation15], %s384
        %p386 = pneg %p168
        %p387 = pneg %p165
        %p388 = scmp.lt.s32.totalorder %s32, 1
        %s389 = scalar_select %p388, %s32, 1
        %s390 = scalar_lea.vmem %s8, %s389
        %p391 = pneg %p194
        %p392 = pneg %p191
        %p393 = pneg %p215
        %p394 = pneg %p212
        %p395 = scmp.lt.s32.totalorder %s32, 1
        %s396 = scalar_select %p395, %s32, 1
        %s397 = scalar_lea.vmem %s6, %s396
        %p398 = scmp.lt.s32.totalorder %s32, 1
        %s399 = scalar_select %p398, %s32, 1
        %s400 = scalar_lea.vmem %s8, %s399
        %p402 = scmp.eq.s32.totalorder %s32, 0
        // Predicated region
        $region69: #{tpu_custom_call.1} parent=47 // pred_check
          %p403 = pneg %p402
        $region70: #{tpu_custom_call.1} parent=47 // pred_check_branch
          %405 = sbr.rel (%p403) target = $region72
        $region71: #{tpu_custom_call.1} parent=47 // pred_region
          %v406 = vld [vmem:[#allocation11] sm:$0xff]
          %v407 = vld [vmem:[#allocation11 + $0x8] sm:$0xff]
          %408 = vst [vmem:[#allocation2] sm:$0xff] %v406
          %409 = vst [vmem:[#allocation2 + $0x8] sm:$0xff] %v407
        $region72: #{tpu_custom_call.1} parent=47 // pred_fallthru
          _
        %410 = vst [vmem:[#allocation3] sm:$0xff] 0.0
        %411 = vst [vmem:[#allocation3 + $0x8] sm:$0xff] 0.0
        loop: start=0, step=1, limit=48
        $region73: #{tpu_custom_call.1} parent=47 // loop_pre_header
          _
        $region74: #{tpu_custom_call.1} parent=47 // loop_header
          %s413 = sphi 0, %s417
          %p414 = scmp.ge.s32.totalorder %s413, 48
        $region75: #{tpu_custom_call.1} parent=47 // loop_header_branch
          %416 = sbr.rel (%p414) target = $region79
        $region76: #{tpu_custom_call.1} parent=47 // loop_body
          %s418 = sld [smem:[#allocation5 + %s413]]
          %s419 = sld [smem:[#allocation6 + %s413]]
          %s420 = scalar_lea.vmem [#allocation2], %s418
          %v421 = vld [vmem:[%s420] sm:$0x1]
          %s422 = scalar_lea.vmem [#allocation12], %s413
          %v423 = vld [vmem:[%s422] sm:$0x1]
          %v424 = vadd.f32 %v421, %v423
          %v425 = vmax.f32 %v424, 0.0
          %s426 = scalar_lea.vmem [#allocation3], %s419
          %v427 = vld [vmem:[%s426] sm:$0x1]
          %v428 = vadd.f32 %v427, %v425
          %429 = vst [vmem:[%s426] sm:$0x1] %v428
        $region77: #{tpu_custom_call.1} parent=47 // loop_footer
          %s417 = sadd.s32 1, %s413
        $region78: #{tpu_custom_call.1} parent=47 // loop_footer_branch
          %412 = sbr.rel target = $region74
        $region79: #{tpu_custom_call.1} parent=47 // loop_exit
          _
        %v430 = vld [vmem:[#allocation2] sm:$0xff]
        %v431 = vld [vmem:[#allocation2 + $0x8] sm:$0xff]
        %s432 = sld [smem:[#allocation7 + %s32]]
        %v433 = vstv %s432
        %v434 = vmul.f32 %v433, %v430
        %v435 = vmul.f32 %v433, %v431
        %v436 = vld [vmem:[#allocation3] sm:$0xff]
        %v437 = vld [vmem:[#allocation3 + $0x8] sm:$0xff]
        %v438 = vadd.f32 %v434, %v436
        %v439 = vadd.f32 %v435, %v437
        %v440 = vpack.c.bf16 %v439, %v438
        %v441 = vld [vmem:[%s348] sm:$0xf]
        %v442 = vld [vmem:[%s348 + $0x4] sm:$0xf]
        %v443 = vld [vmem:[%s348 + $0x8] sm:$0xf]
        %v444 = vld [vmem:[%s348 + $0xc] sm:$0xf]
        %v445 = vld [vmem:[%s348 + $0x10] sm:$0xf]
        %v446 = vld [vmem:[%s348 + $0x14] sm:$0xf]
        %v447 = vld [vmem:[%s348 + $0x18] sm:$0xf]
        %v448 = vld [vmem:[%s348 + $0x1c] sm:$0xf]
        %v449 = vld [vmem:[%s348 + $0x20] sm:$0xf]
        %v450 = vld [vmem:[%s348 + $0x24] sm:$0xf]
        %v451 = vld [vmem:[%s348 + $0x28] sm:$0xf]
        %v452 = vld [vmem:[%s348 + $0x2c] sm:$0xf]
        %v453 = vld [vmem:[%s348 + $0x30] sm:$0xf]
        %v454 = vld [vmem:[%s348 + $0x34] sm:$0xf]
        %v455 = vld [vmem:[%s348 + $0x38] sm:$0xf]
        %v456 = vld [vmem:[%s348 + $0x3c] sm:$0xf]
        %v457 = vld [vmem:[%s397] sm:$0x1]
        %v459 = vlaneseq
        %v460 = vshrl.u32 %v459, 7
        %v461 = vsub.s32 0, %v460
        %v462 = vrot.slane %v457, %v461
        %v480 = vunpack.c.l.b16 %v441
        %v481 = vunpack.c.l.b16 %v442
        %v482 = vunpack.c.l.b16 %v443
        %v483 = vunpack.c.l.b16 %v444
        %v484 = vunpack.c.l.b16 %v445
        %v485 = vunpack.c.l.b16 %v446
        %v486 = vunpack.c.l.b16 %v447
        %v487 = vunpack.c.l.b16 %v448
        %v488 = vunpack.c.l.b16 %v449
        %v489 = vunpack.c.l.b16 %v450
        %v490 = vunpack.c.l.b16 %v451
        %v491 = vunpack.c.l.b16 %v452
        %v492 = vunpack.c.l.b16 %v453
        %v493 = vunpack.c.l.b16 %v454
        %v494 = vunpack.c.l.b16 %v455
        %v495 = vunpack.c.l.b16 %v456
        %v496 = vpack.c.b16 %v481, %v480
        %v497 = vpack.c.b16 %v483, %v482
        %v498 = vpack.c.b16 %v485, %v484
        %v499 = vpack.c.b16 %v487, %v486
        %v500 = vpack.c.b16 %v489, %v488
        %v501 = vpack.c.b16 %v491, %v490
        %v502 = vpack.c.b16 %v493, %v492
        %v503 = vpack.c.b16 %v495, %v494
        %512 = vmatprep.subr.bf16.mxu0 0
        %513 = vmatpush1.bf16.msra.mxu0 %v496
        %514 = vmatprep.subr.bf16.mxu0 0
        %515 = vmatpush1.bf16.msra.mxu0 %v497
        %516 = vmatprep.subr.bf16.mxu0 0
        %517 = vmatpush1.bf16.msra.mxu0 %v498
        %518 = vmatprep.subr.bf16.mxu0 0
        %519 = vmatpush1.bf16.msra.mxu0 %v499
        %520 = vmatprep.subr.bf16.mxu0 0
        %521 = vmatpush1.bf16.msra.mxu0 %v500
        %522 = vmatprep.subr.bf16.mxu0 0
        %523 = vmatpush1.bf16.msra.mxu0 %v501
        %524 = vmatprep.subr.bf16.mxu0 0
        %525 = vmatpush1.bf16.msra.mxu0 %v502
        %526 = vmatprep.subr.bf16.mxu0 0
        %527 = vmatpush1.bf16.msra.mxu0 %v503
        %528 = vmatprep.subr.bf16.mxu0 0
        %529 = vmatpush1.bf16.msra.mxu0 0
        %530 = vmatprep.subr.bf16.mxu0 0
        %531 = vmatpush1.bf16.msra.mxu0 0
        %532 = vmatprep.subr.bf16.mxu0 0
        %533 = vmatpush1.bf16.msra.mxu0 0
        %534 = vmatprep.subr.bf16.mxu0 0
        %535 = vmatpush1.bf16.msra.mxu0 0
        %536 = vmatprep.subr.bf16.mxu0 0
        %537 = vmatpush1.bf16.msra.mxu0 0
        %538 = vmatprep.subr.bf16.mxu0 0
        %539 = vmatpush1.bf16.msra.mxu0 0
        %540 = vmatprep.subr.bf16.mxu0 0
        %541 = vmatpush1.bf16.msra.mxu0 0
        %542 = vmatprep.subr.bf16.mxu0 0
        %543 = vmatpush1.bf16.msra.mxu0 0
        %544 = vmatprep.mubr.bf16.mxu0 0
        %545 = vmatmul.mubr.bf16.gmra.mrb[0].mxu0 %v440
        %v546 = vpop.f32.mrb[0].mxu0
        %v547 = vadd.f32 %v462, %v546
        %v548 = vpop.f32.mrb[0].mxu0
        %v549 = vpop.f32.mrb[0].mxu0
        %v550 = vadd.f32 %v462, %v549
        %v551 = vpop.f32.mrb[0].mxu0
        %552 = vdwg.mxu0
        %v553 = vmax.f32 %v547, 0.0
        %v554 = vmax.f32 %v550, 0.0
        %v555 = vpack.c.bf16 %v554, %v553
        %v556 = vld [vmem:[%s357] sm:$0xf]
        %v557 = vld [vmem:[%s357 + $0x4] sm:$0xf]
        %v558 = vld [vmem:[%s357 + $0x8] sm:$0xf]
        %v559 = vld [vmem:[%s357 + $0xc] sm:$0xf]
        %v560 = vld [vmem:[%s357 + $0x10] sm:$0xf]
        %v561 = vld [vmem:[%s357 + $0x14] sm:$0xf]
        %v562 = vld [vmem:[%s357 + $0x18] sm:$0xf]
        %v563 = vld [vmem:[%s357 + $0x1c] sm:$0xf]
        %v564 = vld [vmem:[%s357 + $0x20] sm:$0xf]
        %v565 = vld [vmem:[%s357 + $0x24] sm:$0xf]
        %v566 = vld [vmem:[%s357 + $0x28] sm:$0xf]
        %v567 = vld [vmem:[%s357 + $0x2c] sm:$0xf]
        %v568 = vld [vmem:[%s357 + $0x30] sm:$0xf]
        %v569 = vld [vmem:[%s357 + $0x34] sm:$0xf]
        %v570 = vld [vmem:[%s357 + $0x38] sm:$0xf]
        %v571 = vld [vmem:[%s357 + $0x3c] sm:$0xf]
        %v572 = vld [vmem:[%s400] sm:$0x1]
        %v574 = vlaneseq
        %v575 = vshrl.u32 %v574, 7
        %v576 = vsub.s32 0, %v575
        %v577 = vrot.slane %v572, %v576
        %v595 = vunpack.c.l.b16 %v556
        %v596 = vunpack.c.l.b16 %v557
        %v597 = vunpack.c.l.b16 %v558
        %v598 = vunpack.c.l.b16 %v559
        %v599 = vunpack.c.l.b16 %v560
        %v600 = vunpack.c.l.b16 %v561
        %v601 = vunpack.c.l.b16 %v562
        %v602 = vunpack.c.l.b16 %v563
        %v603 = vunpack.c.l.b16 %v564
        %v604 = vunpack.c.l.b16 %v565
        %v605 = vunpack.c.l.b16 %v566
        %v606 = vunpack.c.l.b16 %v567
        %v607 = vunpack.c.l.b16 %v568
        %v608 = vunpack.c.l.b16 %v569
        %v609 = vunpack.c.l.b16 %v570
        %v610 = vunpack.c.l.b16 %v571
        %v611 = vpack.c.b16 %v596, %v595
        %v612 = vpack.c.b16 %v598, %v597
        %v613 = vpack.c.b16 %v600, %v599
        %v614 = vpack.c.b16 %v602, %v601
        %v615 = vpack.c.b16 %v604, %v603
        %v616 = vpack.c.b16 %v606, %v605
        %v617 = vpack.c.b16 %v608, %v607
        %v618 = vpack.c.b16 %v610, %v609
        %627 = vmatprep.subr.bf16.mxu0 0
        %628 = vmatpush1.bf16.msra.mxu0 %v611
        %629 = vmatprep.subr.bf16.mxu0 0
        %630 = vmatpush1.bf16.msra.mxu0 %v612
        %631 = vmatprep.subr.bf16.mxu0 0
        %632 = vmatpush1.bf16.msra.mxu0 %v613
        %633 = vmatprep.subr.bf16.mxu0 0
        %634 = vmatpush1.bf16.msra.mxu0 %v614
        %635 = vmatprep.subr.bf16.mxu0 0
        %636 = vmatpush1.bf16.msra.mxu0 %v615
        %637 = vmatprep.subr.bf16.mxu0 0
        %638 = vmatpush1.bf16.msra.mxu0 %v616
        %639 = vmatprep.subr.bf16.mxu0 0
        %640 = vmatpush1.bf16.msra.mxu0 %v617
        %641 = vmatprep.subr.bf16.mxu0 0
        %642 = vmatpush1.bf16.msra.mxu0 %v618
        %643 = vmatprep.subr.bf16.mxu0 0
        %644 = vmatpush1.bf16.msra.mxu0 0
        %645 = vmatprep.subr.bf16.mxu0 0
        %646 = vmatpush1.bf16.msra.mxu0 0
        %647 = vmatprep.subr.bf16.mxu0 0
        %648 = vmatpush1.bf16.msra.mxu0 0
        %649 = vmatprep.subr.bf16.mxu0 0
        %650 = vmatpush1.bf16.msra.mxu0 0
        %651 = vmatprep.subr.bf16.mxu0 0
        %652 = vmatpush1.bf16.msra.mxu0 0
        %653 = vmatprep.subr.bf16.mxu0 0
        %654 = vmatpush1.bf16.msra.mxu0 0
        %655 = vmatprep.subr.bf16.mxu0 0
        %656 = vmatpush1.bf16.msra.mxu0 0
        %657 = vmatprep.subr.bf16.mxu0 0
        %658 = vmatpush1.bf16.msra.mxu0 0
        %659 = vmatprep.mubr.bf16.mxu0 0
        %660 = vmatmul.mubr.bf16.gmra.mrb[0].mxu0 %v555
        %v661 = vpop.f32.mrb[0].mxu0
        %v662 = vadd.f32 %v577, %v661
        %v663 = vpop.f32.mrb[0].mxu0
        %v664 = vpop.f32.mrb[0].mxu0
        %v665 = vadd.f32 %v577, %v664
        %v666 = vpop.f32.mrb[0].mxu0
        %667 = vdwg.mxu0
        %v668 = vadd.f32 %v662, %v430
        %v669 = vadd.f32 %v665, %v431
        %670 = vst [vmem:[#allocation2] sm:$0xff] %v668
        %671 = vst [vmem:[#allocation2 + $0x8] sm:$0xff] %v669
        %p672 = scmp.eq.s32.totalorder %s32, 1
        // Predicated region
        $region80: #{tpu_custom_call.1} parent=47 // pred_check
          %p673 = pneg %p672
        $region81: #{tpu_custom_call.1} parent=47 // pred_check_branch
          %675 = sbr.rel (%p673) target = $region83
        $region82: #{tpu_custom_call.1} parent=47 // pred_region
          %v676 = vmax.f32 %v668, 0.0
          %v677 = vmax.f32 %v669, 0.0
          %678 = vst [vmem:[#allocation16] sm:$0xff] %v676
          %679 = vst [vmem:[#allocation16 + $0x8] sm:$0xff] %v677
        $region83: #{tpu_custom_call.1} parent=47 // pred_fallthru
          _
        // Predicated region
        $region84: #{tpu_custom_call.1} parent=47 // pred_check
          %p680 = pneg %p212
        $region85: #{tpu_custom_call.1} parent=47 // pred_check_branch
          %682 = sbr.rel (%p680) target = $region87
        $region86: #{tpu_custom_call.1} parent=47 // pred_region
          %s684 = ssub.s32 256, 256
          %685 = vsyncadd [#allocation9], %s684
          %s686 = sshll.u32 [#allocation16], 4
          %s687 = int_to_ptr.vmem [resolvable:$true] %s686
          %692 = dma.vmem_to_hbm [thread:$0]  %s687, 256, %s9, [#allocation9], 128, 128, 8
        $region87: #{tpu_custom_call.1} parent=47 // pred_fallthru
          _
        // Predicated region
        $region88: #{tpu_custom_call.1} parent=47 // pred_check
          %p693 = pneg %p212
        $region89: #{tpu_custom_call.1} parent=47 // pred_check_branch
          %695 = sbr.rel (%p693) target = $region91
        $region90: #{tpu_custom_call.1} parent=47 // pred_region
          %696 = dma.done [#allocation9], 256
        $region91: #{tpu_custom_call.1} parent=47 // pred_fallthru
          _
      $region48: #{tpu_custom_call.1} parent=5 // pred_fallthru
        _
      %p697 = scmp.le.s32.totalorder 2, %s27
      // Predicated region
      $region92: #{tpu_custom_call.1} parent=5 // pred_check
        %p698 = pneg %p697
      $region93: #{tpu_custom_call.1} parent=5 // pred_check_branch
        %700 = sbr.rel (%p698) target = $region95
      $region94: #{tpu_custom_call.1} parent=5 // pred_region
        %s701 = ssub.s32 %s27, 2
      $region95: #{tpu_custom_call.1} parent=5 // pred_fallthru
        _
    $region6: #{tpu_custom_call.1} parent=1 // loop_footer
      %s31 = sadd.s32 1, %s27
    $region7: #{tpu_custom_call.1} parent=1 // loop_footer_branch
      %26 = sbr.rel target = $region3
    $region8: #{tpu_custom_call.1} parent=1 // loop_exit
      _
    %702 = vsyncpa [#allocation8], 1
    %s703 = scalar_lea.sflag [#allocation8], 1
    %704 = vsyncpa %s703, 1
    %705 = vsyncpa [#allocation13], 1
    %706 = vsyncpa [#allocation9], 1
    %s707 = scalar_lea.sflag [#allocation9], 1
    %708 = vsyncpa %s707, 1
    %709 = vsyncpa [#allocation10], 1
    %s710 = scalar_lea.sflag [#allocation10], 1
    %711 = vsyncpa %s710, 1

</llo_original>
